<compile_context>
chip_gen: v7x
topology: tpu7x:2x2x1
jax: 0.10.0
libtpu: 0.0.40
codegen_flags: <defaults>
</compile_context>

<pallas_src>
import functools

import jax
import jax.numpy as jnp
from jax.experimental import pallas as pl
from jax.experimental.pallas import tpu as pltpu


def _round_up(x, m):
    return ((x + m - 1) // m) * m


def _device_kind():
    try:
        return jax.devices()[0].device_kind.lower()
    except Exception:
        return ""


def _vmem_capacity_bytes():
    # Prefer the Pallas hardware query; fall back to device_kind heuristics.
    try:
        return int(pltpu.get_tpu_info().vmem_capacity_bytes)
    except Exception:
        pass
    kind = _device_kind()
    if "v7" in kind:
        return 64 << 20          # per-TensorCore VMEM on v7x
    if "v4" in kind or "v5" in kind or "v6" in kind:
        return 128 << 20
    return 64 << 20              # conservative default


def _is_v5e():
    kind = _device_kind()
    return ("v5 lite" in kind) or ("v5e" in kind) or ("v5litepod" in kind)


def _cde_kernel(z_ref, w1_ref, b1_ref, w2_ref, b2_ref, o_ref, *scratch,
                reuse_h, bf16_tanh):
    # z_ref : (TB, hidden)    VMEM
    # w1_ref: (hidden, 128)   VMEM (resident across grid)
    # b1_ref: (1, 128)        VMEM
    # w2_ref: (128, TN)       VMEM (streams per output-column tile)
    # b2_ref: (1, TN)         VMEM
    # o_ref : (TB, TN)        VMEM
    # scratch: optional (TB, 128) VMEM cache of linear1+relu (only when nn>1)

    def linear1():
        h = jnp.dot(z_ref[...], w1_ref[...], preferred_element_type=jnp.float32)
        h = jnp.maximum(h + b1_ref[...].astype(jnp.float32), 0.0)
        # Feed the big matmul in the weight storage dtype (bf16 stays bf16).
        return h.astype(w2_ref.dtype)

    if reuse_h:
        h_ref = scratch[0]

        @pl.when(pl.program_id(1) == 0)
        def _():
            h_ref[...] = linear1()

        h = h_ref[...]
    else:
        h = linear1()

    # linear2 + tanh
    y = jnp.dot(h, w2_ref[...], preferred_element_type=jnp.float32)
    y = y + b2_ref[...].astype(jnp.float32)

    if bf16_tanh:
        # bf16 tanh halves EUP pushes (v6e/v7x); gated off for v5e / f32 out.
        o_ref[...] = jnp.tanh(y.astype(jnp.bfloat16)).astype(o_ref.dtype)
    else:
        o_ref[...] = jnp.tanh(y).astype(o_ref.dtype)


@functools.partial(jax.jit, static_argnames=("input_channels", "hidden_channels"))
def cde_func_forward(z, w1, b1, w2, b2, *, input_channels, hidden_channels):
    """Pallas implementation of CDEFunc.forward.

    z: (..., hidden_channels)
    w1: (hidden_channels, 128), b1: (128,) or (1, 128)
    w2: (128, input_channels*hidden_channels), b2: (out_feat,) or (1, out_feat)
    returns: (..., hidden_channels, input_channels)
    """
    lead_shape = z.shape[:-1]
    B = 1
    for d in lead_shape:
        B *= d
    z2d = z.reshape(B, hidden_channels)
    out_feat = input_channels * hidden_channels

    # Accept 1-D biases from a ported PyTorch checkpoint.
    if b1.ndim == 1:
        b1 = b1.reshape(1, -1)
    if b2.ndim == 1:
        b2 = b2.reshape(1, -1)

    # ---- pad the output feature dim to a lane-dense multiple of 128 --------
    out_pad = _round_up(out_feat, 128)
    if out_pad != out_feat:
        w2 = jnp.pad(w2, ((0, 0), (0, out_pad - out_feat)))
        b2 = jnp.pad(b2, ((0, 0), (0, out_pad - out_feat)))

    itemsize = jnp.dtype(z.dtype).itemsize
    w_itemsize = jnp.dtype(w2.dtype).itemsize

    # ---- output-column tile: lane-dense (multiple of 128) or full extent ---
    MAX_TN = 2048
    TN = out_pad if out_pad <= MAX_TN else MAX_TN   # MAX_TN % 128 == 0

    # ---- batch tile: generation-aware VMEM budget ---------------------------
    vmem_cap = _vmem_capacity_bytes()
    tile_budget = vmem_cap // 3      # ~21 MiB on v7x, ~42 MiB on v5e/v6e
    # per-row cost: double-buffered z + out tiles, h scratch, f32 temporaries.
    per_row = (2 * (hidden_channels + TN) * itemsize
               + 128 * w_itemsize
               + 4 * TN + 4 * 128)
    row_align = max(8, 32 // itemsize)   # 8 f32 / 16 bf16 / 32 int8-fp8
    TB = tile_budget // per_row
    TB = max(row_align, min(TB, 1024))
    TB = (TB // row_align) * row_align
    if TB >= B:
        if B >= 256:
            # Split into >= 2 batch tiles so the "parallel" batch axis feeds
            # both TensorCores on v7x (megacore); near-free on v5e/v6e.
            TB = min(_round_up(pl.cdiv(B, 2), row_align), B)
        else:
            TB = B   # full-extent block is always legal

    nb = pl.cdiv(B, TB)
    nn = pl.cdiv(out_pad, TN)

    # Cache linear1+relu across column tiles only when there is more than one.
    reuse_h = nn > 1
    bf16_tanh = (z.dtype == jnp.bfloat16) and not _is_v5e()
    # NOTE: intentionally no bf16 cast of w2/h for f32 weights (keeps the
    # forward numerically faithful to the PyTorch reference).

    # ---- VMEM limit sized to the chosen tiles (with headroom) --------------
    vmem_needed = (
        2 * TB * hidden_channels * itemsize                 # z double buffer
        + 2 * TB * TN * itemsize                            # out double buffer
        + (TB * 128 * w_itemsize if reuse_h else 0)         # h scratch
        + 2 * (hidden_channels * 128 + 128) * w_itemsize    # w1 + b1
        + 2 * (128 * TN + TN) * w_itemsize                  # w2 + b2 tiles
        + TB * TN * 4 + TB * 128 * 4                        # f32 intermediates
    )
    vmem_limit = int(max(1.3 * vmem_needed + (4 << 20), 16 << 20))
    vmem_limit = int(min(vmem_limit, 0.9 * vmem_cap, 128 << 20))

    cost = pl.CostEstimate(
        flops=int(2 * B * hidden_channels * 128 * (1 if reuse_h else nn)
                  + 2 * B * 128 * out_pad),
        transcendentals=int(B * out_pad),
        bytes_accessed=int(
            itemsize * (B * hidden_channels * (1 if reuse_h else nn)
                        + B * out_pad)
            + w_itemsize * (hidden_channels * 128 + 128
                            + 128 * out_pad + out_pad)),
    )

    kernel = functools.partial(_cde_kernel, reuse_h=reuse_h, bf16_tanh=bf16_tanh)
    scratch_shapes = ([pltpu.VMEM((TB, 128), w2.dtype)] if reuse_h else [])

    out2d = pl.pallas_call(
        kernel,
        out_shape=jax.ShapeDtypeStruct((B, out_pad), z.dtype),
        grid_spec=pltpu.PrefetchScalarGridSpec(
            num_scalar_prefetch=0,
            grid=(nb, nn),
            in_specs=[
                pl.BlockSpec((TB, hidden_channels), lambda i, j: (i, 0)),
                pl.BlockSpec((hidden_channels, 128), lambda i, j: (0, 0)),
                pl.BlockSpec((1, 128), lambda i, j: (0, 0)),
                pl.BlockSpec((128, TN), lambda i, j: (0, j)),
                pl.BlockSpec((1, TN), lambda i, j: (0, j)),
            ],
            out_specs=pl.BlockSpec((TB, TN), lambda i, j: (i, j)),
            scratch_shapes=scratch_shapes,
        ),
        compiler_params=pltpu.CompilerParams(
            dimension_semantics=("parallel",
                                 "arbitrary" if reuse_h else "parallel"),
            vmem_limit_bytes=vmem_limit,
        ),
        cost_estimate=cost,
    )(z2d, w1, b1, w2, b2)

    # Drop the lane padding, then reshape (wrapper-side layout glue only).
    out2d = out2d[:, :out_feat]
    return out2d.reshape(*lead_shape, hidden_channels, input_channels)


def init_params(key, input_channels, hidden_channels, dtype=jnp.float32):
    """Deterministic init mirroring torch.nn.Linear's uniform(-1/sqrt(fan_in))."""
    k1, k2, k3, k4 = jax.random.split(key, 4)
    out_feat = input_channels * hidden_channels

    bound1 = 1.0 / jnp.sqrt(hidden_channels)
    w1 = jax.random.uniform(k1, (hidden_channels, 128), dtype,
                            minval=-bound1, maxval=bound1)
    b1 = jax.random.uniform(k2, (1, 128), dtype, minval=-bound1, maxval=bound1)

    bound2 = 1.0 / jnp.sqrt(128.0)
    w2 = jax.random.uniform(k3, (128, out_feat), dtype,
                            minval=-bound2, maxval=bound2)
    b2 = jax.random.uniform(k4, (1, out_feat), dtype,
                            minval=-bound2, maxval=bound2)
    return w1, b1, w2, b2


if __name__ == "__main__":
    input_channels = 4
    hidden_channels = 32
    batch = 8

    key = jax.random.PRNGKey(0)
    k_z, k_p = jax.random.split(key)

    z = jax.random.normal(k_z, (batch, hidden_channels), dtype=jnp.float32)
    w1, b1, w2, b2 = init_params(k_p, input_channels, hidden_channels)

    out = cde_func_forward(z, w1, b1, w2, b2,
                           input_channels=input_channels,
                           hidden_channels=hidden_channels)
    out = jax.block_until_ready(out)

    # Reference check in plain JAX (same math).
    ref = jnp.tanh(jnp.maximum(z @ w1 + b1, 0.0) @ w2 + b2).reshape(
        batch, hidden_channels, input_channels)
    assert out.shape == (batch, hidden_channels, input_channels)
    assert jnp.allclose(out, ref, atol=1e-5, rtol=1e-5)

    print("KERNEL_OK")
</pallas_src>

<mosaic_0001>
module attributes {stable_mosaic.version = 11 : i64} {
  func.func @_cde_kernel(%arg0: i32, %arg1: i32, %arg2: memref<8x32xf32, #tpu.memory_space<vmem>>, %arg3: memref<32x128xf32, #tpu.memory_space<vmem>>, %arg4: memref<1x128xf32, #tpu.memory_space<vmem>>, %arg5: memref<128x128xf32, #tpu.memory_space<vmem>>, %arg6: memref<1x128xf32, #tpu.memory_space<vmem>>, %arg7: memref<8x128xf32, #tpu.memory_space<vmem>>) attributes {dimension_semantics = [#tpu.dimension_semantics<parallel>, #tpu.dimension_semantics<parallel>], iteration_bounds = array<i64: 1, 1>, scalar_prefetch = 0 : i64, scratch_operands = 0 : i64, tpu.core_type = #tpu.core_type<tc>, window_params = [{transform_indices = @transform_0, window_bounds = array<i64: 8, 32>}, {pipeline_mode = #tpu.pipeline_mode<synchronous>, transform_indices = @transform_1, window_bounds = array<i64: 32, 128>}, {pipeline_mode = #tpu.pipeline_mode<synchronous>, transform_indices = @transform_2, window_bounds = array<i64: 1, 128>}, {transform_indices = @transform_3, window_bounds = array<i64: 128, 128>}, {transform_indices = @transform_4, window_bounds = array<i64: 1, 128>}, {transform_indices = @transform_5, window_bounds = array<i64: 8, 128>}]} {
    %c0 = arith.constant 0 : index
    %c0_0 = arith.constant 0 : index
    %0 = vector.load %arg2[%c0, %c0_0] : memref<8x32xf32, #tpu.memory_space<vmem>>, vector<8x32xf32>
    %c0_1 = arith.constant 0 : index
    %c0_2 = arith.constant 0 : index
    %1 = vector.load %arg3[%c0_1, %c0_2] : memref<32x128xf32, #tpu.memory_space<vmem>>, vector<32x128xf32>
    %cst = arith.constant dense<0.000000e+00> : vector<8x128xf32>
    %2 = tpu.matmul %0, %1, %cst {dimension_numbers = #tpu.dot_dimension_numbers<[1], [0], [0], [1], [0, 0, 1, 1], [], []>} : vector<8x32xf32>, vector<32x128xf32>, vector<8x128xf32> -> vector<8x128xf32>
    %c0_3 = arith.constant 0 : index
    %c0_4 = arith.constant 0 : index
    %3 = vector.load %arg4[%c0_3, %c0_4] : memref<1x128xf32, #tpu.memory_space<vmem>>, vector<1x128xf32>
    %4 = vector.broadcast %3 : vector<1x128xf32> to vector<8x128xf32>
    %5 = arith.addf %2, %4 : vector<8x128xf32>
    %cst_5 = arith.constant 0.000000e+00 : f32
    %6 = vector.broadcast %cst_5 : f32 to vector<8x128xf32>
    %7 = arith.maximumf %5, %6 : vector<8x128xf32>
    %c0_6 = arith.constant 0 : index
    %c0_7 = arith.constant 0 : index
    %8 = vector.load %arg5[%c0_6, %c0_7] : memref<128x128xf32, #tpu.memory_space<vmem>>, vector<128x128xf32>
    %cst_8 = arith.constant dense<0.000000e+00> : vector<8x128xf32>
    %9 = tpu.matmul %7, %8, %cst_8 {dimension_numbers = #tpu.dot_dimension_numbers<[1], [0], [0], [1], [0, 0, 1, 1], [], []>} : vector<8x128xf32>, vector<128x128xf32>, vector<8x128xf32> -> vector<8x128xf32>
    %c0_9 = arith.constant 0 : index
    %c0_10 = arith.constant 0 : index
    %10 = vector.load %arg6[%c0_9, %c0_10] : memref<1x128xf32, #tpu.memory_space<vmem>>, vector<1x128xf32>
    %11 = vector.broadcast %10 : vector<1x128xf32> to vector<8x128xf32>
    %12 = arith.addf %9, %11 : vector<8x128xf32>
    %13 = math.tanh %12 : vector<8x128xf32>
    %c0_11 = arith.constant 0 : index
    %c0_12 = arith.constant 0 : index
    %14 = vector.load %arg7[%c0_11, %c0_12] : memref<8x128xf32, #tpu.memory_space<vmem>>, vector<8x128xf32>
    tpu.vector_store %arg7[%c0_11, %c0_12], %13 {strides = array<i32>} : memref<8x128xf32, #tpu.memory_space<vmem>>, vector<8x128xf32>,
    return
  }
  func.func @transform_0(%arg0: i32, %arg1: i32) -> (i32, i32) {
    %c0_i32 = arith.constant 0 : i32
    %c0_i32_0 = arith.constant 0 : i32
    return %arg0, %c0_i32 : i32, i32
  }
  func.func @transform_1(%arg0: i32, %arg1: i32) -> (i32, i32) {
    %c0_i32 = arith.constant 0 : i32
    %c0_i32_0 = arith.constant 0 : i32
    %c0_i32_1 = arith.constant 0 : i32
    return %c0_i32, %c0_i32_0 : i32, i32
  }
  func.func @transform_2(%arg0: i32, %arg1: i32) -> (i32, i32) {
    %c0_i32 = arith.constant 0 : i32
    %c0_i32_0 = arith.constant 0 : i32
    %c0_i32_1 = arith.constant 0 : i32
    return %c0_i32, %c0_i32_0 : i32, i32
  }
  func.func @transform_3(%arg0: i32, %arg1: i32) -> (i32, i32) {
    %c0_i32 = arith.constant 0 : i32
    %c0_i32_0 = arith.constant 0 : i32
    return %c0_i32, %arg1 : i32, i32
  }
  func.func @transform_4(%arg0: i32, %arg1: i32) -> (i32, i32) {
    %c0_i32 = arith.constant 0 : i32
    %c0_i32_0 = arith.constant 0 : i32
    return %c0_i32, %arg1 : i32, i32
  }
  func.func @transform_5(%arg0: i32, %arg1: i32) -> (i32, i32) {
    %c0_i32 = arith.constant 0 : i32
    return %arg0, %arg1 : i32, i32
  }
}

</mosaic_0001>

<llo_original>
// kernel: cde_func_forward.1
$region0: #{cde_func_forward.1}
  #allocation0 [shape = 'u32[]', space=smem, size = 0x4, offset = 0x4, fixed_abs, tag = 'smem constant byte address 0x4 - core index']
  #allocation1 [shape = 'u32[144,128]{1,0:T(1,128)}', space=vmem, size = 0x12000, scoped, tag = 'internal scratch']
  %s0 = inlined_call_operand.hbm [shape: f32[8,32], index: 0, kind: input, shape index: {}]
  %s1 = inlined_call_operand.hbm [shape: f32[32,128], index: 1, kind: input, shape index: {}]
  %s2 = inlined_call_operand.vmem [shape: f32[1,128], index: 2, kind: input, shape index: {}]
  %s3 = inlined_call_operand.hbm [shape: f32[128,128], index: 3, kind: input, shape index: {}]
  %s4 = inlined_call_operand.vmem [shape: f32[1,128], index: 4, kind: input, shape index: {}]
  %s5 = inlined_call_operand.vmem [shape: f32[8,128], index: 5, kind: output, shape index: {}]
  %s6 = sld [smem:[#allocation0]]
  $region42: #{cde_func_forward.1} parent=0
    _
  %s8 = ssub.s32 1, %s6
  %s9 = scalar_select 0, %s8, %s6
  $region1: #{cde_func_forward.1} parent=0
    #allocation2 [shape = 'u8[4096]{0}', space=vmem, size = 0x1000, scoped, tag = 'input window, operand 0, single buffered']
    #allocation3 [shape = 's32[1]{0}', space=sflag, size = 0x4, scoped, tag = 'scoped memory for cde_func_forward.1']
    #allocation4 [shape = 'u8[16384]{0}', space=vmem, size = 0x4000, scoped, tag = 'input window, operand 1, single buffered']
    #allocation5 [shape = 's32[1]{0}', space=sflag, size = 0x4, scoped, tag = 'scoped memory for cde_func_forward.1']
    #allocation6 [shape = 'u8[65536]{0}', space=vmem, size = 0x10000, scoped, tag = 'input window, operand 3, single buffered']
    %10 = vsyncpa [#allocation3], 0
    %11 = vsyncpa [#allocation5], 0
    // Predicated region
    $region2: #{cde_func_forward.1} parent=1 // pred_check
      _
    $region3: #{cde_func_forward.1} parent=1 // pred_check_branch
      %13 = sbr.rel (0) target = $region5
    $region4: #{cde_func_forward.1} parent=1 // pred_region
      %s15 = ssub.s32 128, 128
      %16 = vsyncadd [#allocation3], %s15
      %s18 = sshll.u32 [#allocation2], 4
      %s19 = int_to_ptr.vmem [resolvable:$true] %s18
      %21 = dma.hbm_to_vmem [thread:$0]  %s0, 128, %s19, [#allocation3]
    $region5: #{cde_func_forward.1} parent=1 // pred_fallthru
      _
    // Predicated region
    $region6: #{cde_func_forward.1} parent=1 // pred_check
      _
    $region7: #{cde_func_forward.1} parent=1 // pred_check_branch
      %23 = sbr.rel (0) target = $region9
    $region8: #{cde_func_forward.1} parent=1 // pred_region
      %s25 = ssub.s32 512, 512
      %26 = vsyncadd [#allocation5], %s25
      %s27 = sshll.u32 [#allocation4], 4
      %s28 = int_to_ptr.vmem [resolvable:$true] %s27
      %33 = dma.hbm_to_vmem [thread:$0]  %s1, 512, %s28, [#allocation5], 128, 128, 8
    $region9: #{cde_func_forward.1} parent=1 // pred_fallthru
      _
    // Predicated region
    $region10: #{cde_func_forward.1} parent=1 // pred_check
      _
    $region11: #{cde_func_forward.1} parent=1 // pred_check_branch
      %35 = sbr.rel (0) target = $region13
    $region12: #{cde_func_forward.1} parent=1 // pred_region
      _
    $region13: #{cde_func_forward.1} parent=1 // pred_fallthru
      _
    // Predicated region
    $region14: #{cde_func_forward.1} parent=1 // pred_check
      _
    $region15: #{cde_func_forward.1} parent=1 // pred_check_branch
      %37 = sbr.rel (0) target = $region17
    $region16: #{cde_func_forward.1} parent=1 // pred_region
      %s39 = ssub.s32 2048, 2048
      %40 = vsyncadd [#allocation5], %s39
      %s41 = sshll.u32 [#allocation6], 4
      %s42 = int_to_ptr.vmem [resolvable:$true] %s41
      %47 = dma.hbm_to_vmem [thread:$0]  %s3, 2048, %s42, [#allocation5], 128, 128, 8
    $region17: #{cde_func_forward.1} parent=1 // pred_fallthru
      _
    // Predicated region
    $region18: #{cde_func_forward.1} parent=1 // pred_check
      _
    $region19: #{cde_func_forward.1} parent=1 // pred_check_branch
      %49 = sbr.rel (0) target = $region21
    $region20: #{cde_func_forward.1} parent=1 // pred_region
      _
    $region21: #{cde_func_forward.1} parent=1 // pred_fallthru
      _
    // Predicated region
    $region22: #{cde_func_forward.1} parent=1 // pred_check
      _
    $region23: #{cde_func_forward.1} parent=1 // pred_check_branch
      %51 = sbr.rel (0) target = $region25
    $region24: #{cde_func_forward.1} parent=1 // pred_region
      %52 = dma.done [#allocation3], 128
    $region25: #{cde_func_forward.1} parent=1 // pred_fallthru
      _
    // Predicated region
    $region26: #{cde_func_forward.1} parent=1 // pred_check
      _
    $region27: #{cde_func_forward.1} parent=1 // pred_check_branch
      %54 = sbr.rel (0) target = $region29
    $region28: #{cde_func_forward.1} parent=1 // pred_region
      %55 = dma.done [#allocation5], 512
    $region29: #{cde_func_forward.1} parent=1 // pred_fallthru
      _
    // Predicated region
    $region30: #{cde_func_forward.1} parent=1 // pred_check
      _
    $region31: #{cde_func_forward.1} parent=1 // pred_check_branch
      %57 = sbr.rel (0) target = $region33
    $region32: #{cde_func_forward.1} parent=1 // pred_region
      %58 = dma.done [#allocation5], 2048
    $region33: #{cde_func_forward.1} parent=1 // pred_fallthru
      _
    %v59 = vld [vmem:[#allocation2] sm:$0xff]
    %v60 = vld [vmem:[#allocation4] sm:$0xff]
    %v61 = vld [vmem:[#allocation4 + $0x8] sm:$0xff]
    %v62 = vld [vmem:[#allocation4 + $0x10] sm:$0xff]
    %v63 = vld [vmem:[#allocation4 + $0x18] sm:$0xff]
    %v64 = vld [vmem:[%s2] sm:$0x1]
    %v66 = vlaneseq
    %v67 = vshrl.u32 %v66, 7
    %v68 = vsub.s32 0, %v67
    %v69 = vrot.slane %v64, %v68
    %vm71 = vcmask 261120
    %v73 = vsel %vm71, %v59, 0
    %75 = vmatprep.subr.mxu0 0.0
    %76 = vmatpush1.msra.mxu0 %v60
    %77 = vmatprep.subr.mxu0 0.0
    %78 = vmatpush1.msra.mxu0 %v61
    %79 = vmatprep.subr.mxu0 0.0
    %80 = vmatpush1.msra.mxu0 %v62
    %81 = vmatprep.subr.mxu0 0.0
    %82 = vmatpush1.msra.mxu0 %v63
    %83 = vmatprep.subr.mxu0 0.0
    %84 = vmatpush1.msra.mxu0 0.0
    %85 = vmatprep.subr.mxu0 0.0
    %86 = vmatpush1.msra.mxu0 0.0
    %87 = vmatprep.subr.mxu0 0.0
    %88 = vmatpush1.msra.mxu0 0.0
    %89 = vmatprep.subr.mxu0 0.0
    %90 = vmatpush1.msra.mxu0 0.0
    %91 = vmatprep.subr.mxu0 0.0
    %92 = vmatpush1.msra.mxu0 0.0
    %93 = vmatprep.subr.mxu0 0.0
    %94 = vmatpush1.msra.mxu0 0.0
    %95 = vmatprep.subr.mxu0 0.0
    %96 = vmatpush1.msra.mxu0 0.0
    %97 = vmatprep.subr.mxu0 0.0
    %98 = vmatpush1.msra.mxu0 0.0
    %99 = vmatprep.subr.mxu0 0.0
    %100 = vmatpush1.msra.mxu0 0.0
    %101 = vmatprep.subr.mxu0 0.0
    %102 = vmatpush1.msra.mxu0 0.0
    %103 = vmatprep.subr.mxu0 0.0
    %104 = vmatpush1.msra.mxu0 0.0
    %105 = vmatprep.subr.mxu0 0.0
    %106 = vmatpush1.msra.mxu0 0.0
    %107 = vmatprep.subr.mxu0 0.0
    %108 = vmatpush1.msra.mxu0 0.0
    %109 = vmatprep.subr.mxu0 0.0
    %110 = vmatpush1.msra.mxu0 0.0
    %111 = vmatprep.subr.mxu0 0.0
    %112 = vmatpush1.msra.mxu0 0.0
    %113 = vmatprep.subr.mxu0 0.0
    %114 = vmatpush1.msra.mxu0 0.0
    %115 = vmatprep.subr.mxu0 0.0
    %116 = vmatpush1.msra.mxu0 0.0
    %117 = vmatprep.subr.mxu0 0.0
    %118 = vmatpush1.msra.mxu0 0.0
    %119 = vmatprep.subr.mxu0 0.0
    %120 = vmatpush1.msra.mxu0 0.0
    %121 = vmatprep.subr.mxu0 0.0
    %122 = vmatpush1.msra.mxu0 0.0
    %123 = vmatprep.subr.mxu0 0.0
    %124 = vmatpush1.msra.mxu0 0.0
    %125 = vmatprep.subr.mxu0 0.0
    %126 = vmatpush1.msra.mxu0 0.0
    %127 = vmatprep.subr.mxu0 0.0
    %128 = vmatpush1.msra.mxu0 0.0
    %129 = vmatprep.subr.mxu0 0.0
    %130 = vmatpush1.msra.mxu0 0.0
    %131 = vmatprep.subr.mxu0 0.0
    %132 = vmatpush1.msra.mxu0 0.0
    %133 = vmatprep.subr.mxu0 0.0
    %134 = vmatpush1.msra.mxu0 0.0
    %135 = vmatprep.subr.mxu0 0.0
    %136 = vmatpush1.msra.mxu0 0.0
    %137 = vmatprep.subr.mxu0 0.0
    %138 = vmatpush1.msra.mxu0 0.0
    %139 = vmatprep.mubr.f32.mxu0 0.0
    %140 = vmatmul.mubr.f32.gmra.mrb[0].mxu0 %v73
    %v141 = vpop.f32.mrb[0].mxu0
    %v142 = vadd.f32 %v69, %v141
    %v143 = vpop.f32.mrb[0].mxu0
    %144 = vdwg.mxu0
    %v145 = vmax.f32 %v142, 0.0
    %v146 = vld [vmem:[#allocation6] sm:$0xff]
    %v147 = vld [vmem:[#allocation6 + $0x8] sm:$0xff]
    %v148 = vld [vmem:[#allocation6 + $0x10] sm:$0xff]
    %v149 = vld [vmem:[#allocation6 + $0x18] sm:$0xff]
    %v150 = vld [vmem:[#allocation6 + $0x20] sm:$0xff]
    %v151 = vld [vmem:[#allocation6 + $0x28] sm:$0xff]
    %v152 = vld [vmem:[#allocation6 + $0x30] sm:$0xff]
    %v153 = vld [vmem:[#allocation6 + $0x38] sm:$0xff]
    %v154 = vld [vmem:[#allocation6 + $0x40] sm:$0xff]
    %v155 = vld [vmem:[#allocation6 + $0x48] sm:$0xff]
    %v156 = vld [vmem:[#allocation6 + $0x50] sm:$0xff]
    %v157 = vld [vmem:[#allocation6 + $0x58] sm:$0xff]
    %v158 = vld [vmem:[#allocation6 + $0x60] sm:$0xff]
    %v159 = vld [vmem:[#allocation6 + $0x68] sm:$0xff]
    %v160 = vld [vmem:[#allocation6 + $0x70] sm:$0xff]
    %v161 = vld [vmem:[#allocation6 + $0x78] sm:$0xff]
    %v162 = vld [vmem:[%s4] sm:$0x1]
    %v164 = vlaneseq
    %v165 = vshrl.u32 %v164, 7
    %v166 = vsub.s32 0, %v165
    %v167 = vrot.slane %v162, %v166
    %169 = vmatprep.subr.mxu0 0.0
    %170 = vmatpush1.msra.mxu0 %v146
    %171 = vmatprep.subr.mxu0 0.0
    %172 = vmatpush1.msra.mxu0 %v147
    %173 = vmatprep.subr.mxu0 0.0
    %174 = vmatpush1.msra.mxu0 %v148
    %175 = vmatprep.subr.mxu0 0.0
    %176 = vmatpush1.msra.mxu0 %v149
    %177 = vmatprep.subr.mxu0 0.0
    %178 = vmatpush1.msra.mxu0 %v150
    %179 = vmatprep.subr.mxu0 0.0
    %180 = vmatpush1.msra.mxu0 %v151
    %181 = vmatprep.subr.mxu0 0.0
    %182 = vmatpush1.msra.mxu0 %v152
    %183 = vmatprep.subr.mxu0 0.0
    %184 = vmatpush1.msra.mxu0 %v153
    %185 = vmatprep.subr.mxu0 0.0
    %186 = vmatpush1.msra.mxu0 %v154
    %187 = vmatprep.subr.mxu0 0.0
    %188 = vmatpush1.msra.mxu0 %v155
    %189 = vmatprep.subr.mxu0 0.0
    %190 = vmatpush1.msra.mxu0 %v156
    %191 = vmatprep.subr.mxu0 0.0
    %192 = vmatpush1.msra.mxu0 %v157
    %193 = vmatprep.subr.mxu0 0.0
    %194 = vmatpush1.msra.mxu0 %v158
    %195 = vmatprep.subr.mxu0 0.0
    %196 = vmatpush1.msra.mxu0 %v159
    %197 = vmatprep.subr.mxu0 0.0
    %198 = vmatpush1.msra.mxu0 %v160
    %199 = vmatprep.subr.mxu0 0.0
    %200 = vmatpush1.msra.mxu0 %v161
    %201 = vmatprep.subr.mxu0 0.0
    %202 = vmatpush1.msra.mxu0 0.0
    %203 = vmatprep.subr.mxu0 0.0
    %204 = vmatpush1.msra.mxu0 0.0
    %205 = vmatprep.subr.mxu0 0.0
    %206 = vmatpush1.msra.mxu0 0.0
    %207 = vmatprep.subr.mxu0 0.0
    %208 = vmatpush1.msra.mxu0 0.0
    %209 = vmatprep.subr.mxu0 0.0
    %210 = vmatpush1.msra.mxu0 0.0
    %211 = vmatprep.subr.mxu0 0.0
    %212 = vmatpush1.msra.mxu0 0.0
    %213 = vmatprep.subr.mxu0 0.0
    %214 = vmatpush1.msra.mxu0 0.0
    %215 = vmatprep.subr.mxu0 0.0
    %216 = vmatpush1.msra.mxu0 0.0
    %217 = vmatprep.subr.mxu0 0.0
    %218 = vmatpush1.msra.mxu0 0.0
    %219 = vmatprep.subr.mxu0 0.0
    %220 = vmatpush1.msra.mxu0 0.0
    %221 = vmatprep.subr.mxu0 0.0
    %222 = vmatpush1.msra.mxu0 0.0
    %223 = vmatprep.subr.mxu0 0.0
    %224 = vmatpush1.msra.mxu0 0.0
    %225 = vmatprep.subr.mxu0 0.0
    %226 = vmatpush1.msra.mxu0 0.0
    %227 = vmatprep.subr.mxu0 0.0
    %228 = vmatpush1.msra.mxu0 0.0
    %229 = vmatprep.subr.mxu0 0.0
    %230 = vmatpush1.msra.mxu0 0.0
    %231 = vmatprep.subr.mxu0 0.0
    %232 = vmatpush1.msra.mxu0 0.0
    %233 = vmatprep.mubr.f32.mxu0 0.0
    %234 = vmatmul.mubr.f32.gmra.mrb[0].mxu0 %v145
    %v235 = vpop.f32.mrb[0].mxu0
    %v236 = vadd.f32 %v167, %v235
    %v237 = vpop.f32.mrb[0].mxu0
    %238 = vdwg.mxu0
    %v239 = vtanh.pop %v236
    %240 = vst [vmem:[%s5] sm:$0xff] %v239
    // Predicated region
    $region34: #{cde_func_forward.1} parent=1 // pred_check
      _
    $region35: #{cde_func_forward.1} parent=1 // pred_check_branch
      %242 = sbr.rel (0) target = $region37
    $region36: #{cde_func_forward.1} parent=1 // pred_region
      _
    $region37: #{cde_func_forward.1} parent=1 // pred_fallthru
      _
    // Predicated region
    $region38: #{cde_func_forward.1} parent=1 // pred_check
      _
    $region39: #{cde_func_forward.1} parent=1 // pred_check_branch
      %244 = sbr.rel (0) target = $region41
    $region40: #{cde_func_forward.1} parent=1 // pred_region
      _
    $region41: #{cde_func_forward.1} parent=1 // pred_fallthru
      _
    %245 = vsyncpa [#allocation3], 1
    %246 = vsyncpa [#allocation5], 1

</llo_original>
